<compile_context>
chip_gen: v6e
topology: v6e:2x2x1
jax: 0.10.0
libtpu: 0.0.40
codegen_flags: <defaults>
</compile_context>

<pallas_src>
import functools

import numpy as np
import jax
import jax.numpy as jnp
from jax.experimental import pallas as pl
from jax.experimental.pallas import tpu as pltpu


# --------------------------------------------------------------------------- kernel

def attn_decoder_kernel(
    x_ref, h_ref, enc_ref,                       # activations: (B,H) f32, (B,H) f32, (B,L,H) bf16
    w_ih_ref, w_hh_ref, b_gates_ref,             # fused GRU params (bf16 weights, packed f32 bias)
    w_cat_h_ref, w_cat_c_ref, b_cat_ref,         # concat Linear split into two (H,H) halves
    w_out_ref, b_out_ref,                        # streamed (H, TILE_V) vocab tile + bias tile
    out_ref, hid_ref,                            # outputs: (B, V_pad) probs, (B, H) new hidden
    cat_scratch,                                 # VMEM (B, H) bf16, resident across vocab tiles
):
    j = pl.program_id(0)
    n_tiles = pl.num_programs(0)
    H = hid_ref.shape[-1]
    tile_v = w_out_ref.shape[-1]

    # ---- step 0: GRU cell + attention + concat projection (small, stays resident) ----
    @pl.when(j == 0)
    def _():
        x = x_ref[...]                                   # (B, H) f32
        h = h_ref[...]                                   # (B, H) f32
        b = b_gates_ref[...]                             # (1, 4H): [b_rz | b_ih_n | b_hh_n]

        # Fused GRU gates: two bf16 MXU matmuls, f32 accumulation, gate order [r|z|n].
        gi = jnp.dot(x.astype(jnp.bfloat16), w_ih_ref[...],
                     preferred_element_type=jnp.float32)                    # (B, 3H)
        gh = jnp.dot(h.astype(jnp.bfloat16), w_hh_ref[...],
                     preferred_element_type=jnp.float32)                    # (B, 3H)
        rz = jax.nn.sigmoid(gi[:, :2 * H] + gh[:, :2 * H] + b[:, :2 * H])   # (B, 2H)
        r, z = rz[:, :H], rz[:, H:]
        n = jnp.tanh(gi[:, 2 * H:] + b[:, 2 * H:3 * H]
                     + r * (gh[:, 2 * H:] + b[:, 3 * H:]))
        h_new = (1.0 - z) * n + z * h                    # (B, H) f32
        hid_ref[...] = h_new

        # Luong dot attention on the MXU (enc already bf16 from the wrapper).
        enc = enc_ref[...]                               # (B, L, H) bf16
        q = h_new.astype(jnp.bfloat16)[:, None, :]       # (B, 1, H)
        energies = jnp.einsum("bqh,blh->bql", q, enc,
                              preferred_element_type=jnp.float32)[:, 0, :]  # (B, L)
        m = jnp.max(energies, axis=-1, keepdims=True)
        p = jnp.exp(energies - m)
        attn = p * pl.reciprocal(jnp.sum(p, axis=-1, keepdims=True), approx=True)
        context = jnp.einsum("bql,blh->bqh",
                             attn.astype(jnp.bfloat16)[:, None, :], enc,
                             preferred_element_type=jnp.float32)[:, 0, :]   # (B, H)

        # concat Linear(2H -> H) as two (H,H) matmuls -- no (B,2H) lane-concat temp.
        concat_out = jnp.tanh(
            jnp.dot(h_new.astype(jnp.bfloat16), w_cat_h_ref[...],
                    preferred_element_type=jnp.float32)
            + jnp.dot(context.astype(jnp.bfloat16), w_cat_c_ref[...],
                      preferred_element_type=jnp.float32)
            + b_cat_ref[...])                            # (B, H) f32
        cat_scratch[...] = concat_out.astype(jnp.bfloat16)

    # ---- every step: one lane-dense TILE_V-wide tile of the vocab projection ----
    logits = jnp.dot(cat_scratch[...], w_out_ref[...],
                     preferred_element_type=jnp.float32) + b_out_ref[...]   # (B, tile_v)
    off = pl.multiple_of(j * tile_v, tile_v)
    out_ref[:, pl.ds(off, tile_v)] = logits

    # ---- last step: softmax over the full resident (B, V_pad) logit row ----
    @pl.when(j == n_tiles - 1)
    def _():
        logits_all = out_ref[...]                        # (B, V_pad) f32
        m2 = jnp.max(logits_all, axis=-1, keepdims=True)
        e2 = jnp.exp(logits_all - m2)                    # padded cols (bias -1e30) -> 0
        out_ref[...] = e2 * pl.reciprocal(jnp.sum(e2, axis=-1, keepdims=True),
                                          approx=True)
        # TODO(synk): online-softmax (per-tile exp + running max/sum) would hide this
        #             epilogue under the w_out stream; second-order at current sizes.


# ----------------------------------------------------------------- tiling / weight prep

def _round_up(x, m):
    return ((x + m - 1) // m) * m


def _pad_last(a, target, value=0.0):
    pad = target - a.shape[-1]
    if pad == 0:
        return a
    widths = [(0, 0)] * (a.ndim - 1) + [(0, pad)]
    return jnp.pad(a, widths, constant_values=value)


def select_vocab_tiling(batch, hidden, enc_len, vocab):
    """Generation-aware vocab tiling: the largest lane-dense (H, TILE_V) w_out tile that
    fits the VMEM budget (64 MiB on v7x, 128 MiB on v5e/v6e), kept a multiple of 256 so
    the logits matmul fills the 256-wide MXU on v6e/v7x.  Returns Python ints
    (tile_v, v_pad, vmem_limit_bytes)."""
    B, H, L, V = batch, hidden, enc_len, vocab
    try:
        vmem_cap = int(pltpu.get_tpu_info().vmem_capacity_bytes)
    except Exception:  # be conservative if the query is unavailable: assume v7x per-TC
        vmem_cap = 64 * 1024 * 1024

    v128 = _round_up(V, 128)
    budget = int(vmem_cap * 0.70)            # headroom for compiler-internal scratch
    # Blocks whose size does not scale with TILE_V (x2 = pipeline double-buffering).
    fixed = (
        2 * B * H * 4              # x
        + 2 * B * H * 4            # h0
        + 2 * B * L * H * 2        # encoder outputs (bf16)
        + 2 * 2 * H * 3 * H * 2    # W_ih, W_hh (bf16)
        + 2 * 4 * H * 4            # packed GRU bias
        + 2 * 2 * H * H * 2        # W_cat halves (bf16)
        + 2 * H * 4                # b_cat
        + 2 * B * v128 * 4         # resident probability row (f32)
        + 2 * B * H * 4            # new hidden
        + B * H * 2                # concat scratch (bf16)
    )
    # Cost per vocab lane: double-buffered bf16 w_out column + f32 bias + out-row growth.
    per_lane = 2 * (H * 2 + 4) + B * 4
    avail = max(budget - fixed, per_lane * 128)
    tile = avail // per_lane
    tile = min(tile, 8192, v128)             # 8k cap: DMA already well amortized
    tile = (tile // 256) * 256 if tile >= 256 else 128
    tile = min(tile, v128)
    v_pad = _round_up(V, tile)

    vmem_limit = min(vmem_cap, max(32 * 1024 * 1024,
                                   fixed + per_lane * tile + (8 << 20)))
    return int(tile), int(v_pad), int(vmem_limit)


def make_params(key, hidden_size, output_size):
    H, V = hidden_size, output_size
    ks = jax.random.split(key, 9)
    bf16 = jnp.bfloat16
    s = 1.0 / np.sqrt(H)
    s2 = 1.0 / np.sqrt(2 * H)

    def u(k, shape, scale, dtype=jnp.float32):
        return jax.random.uniform(k, shape, jnp.float32, -scale, scale).astype(dtype)

    return dict(
        embedding=jax.random.normal(ks[0], (V, H), jnp.float32),
        # fused GRU weights, pre-transposed (kernel does x @ W); gate order [r|z|n]
        w_ih=u(ks[1], (H, 3 * H), s, bf16),
        w_hh=u(ks[2], (H, 3 * H), s, bf16),
        b_ih=u(ks[3], (1, 3 * H), s),
        b_hh=u(ks[4], (1, 3 * H), s),
        # concat Linear(2H -> H): rows [0:H] act on rnn_output, rows [H:2H] on context
        w_cat=u(ks[5], (2 * H, H), s2, bf16),
        b_cat=u(ks[6], (1, H), s2),
        # out Linear(H -> V)
        w_out=u(ks[7], (H, V), s, bf16),
        b_out=u(ks[8], (1, V), s),
    )


def prepare_decoder_params(params, tile_v, v_pad):
    """One-time weight prep (pack / split / pad) -- reuse across all decode steps."""
    H = params["b_cat"].shape[1]
    b_ih, b_hh = params["b_ih"], params["b_hh"]
    b_gates = jnp.concatenate(
        [b_ih[:, :2 * H] + b_hh[:, :2 * H],       # r|z biases pre-added
         b_ih[:, 2 * H:],                         # n: input-side bias
         b_hh[:, 2 * H:]], axis=1)                # n: hidden-side bias (scaled by r)
    return dict(
        embedding=params["embedding"],
        w_ih=params["w_ih"], w_hh=params["w_hh"], b_gates=b_gates,
        w_cat_h=params["w_cat"][:H], w_cat_c=params["w_cat"][H:],
        b_cat=params["b_cat"],
        w_out=_pad_last(params["w_out"], v_pad, 0.0),        # pad cols contribute 0
        b_out=_pad_last(params["b_out"], v_pad, -1e30),      # pad logits -> exp == 0
    )


# --------------------------------------------------------------------------- forward

def attn_decoder_forward(prep, input_step, last_hidden, encoder_outputs,
                         *, tile_v, v_pad, vmem_limit):
    """input_step: (1, B) int32 ids; last_hidden: (1, B, H); encoder_outputs: (L, B, H)."""
    emb = prep["embedding"][input_step[0]]                # (B, H)  embedding gather = glue
    # embedding_dropout: identity in eval mode
    h0 = last_hidden[0]                                   # (B, H)
    # bf16 cast fused with the (L,B,H)->(B,L,H) transpose: halves enc DMA + residency.
    # TODO(synk): have the encoder emit batch-major bf16 so this transpose disappears.
    enc = jnp.transpose(encoder_outputs, (1, 0, 2)).astype(jnp.bfloat16)

    B, H = emb.shape
    L = enc.shape[1]
    V = prep["embedding"].shape[0]
    n_tiles = v_pad // tile_v

    const2 = lambda j: (0, 0)
    const3 = lambda j: (0, 0, 0)

    cost = pl.CostEstimate(
        flops=int(2 * B * H * v_pad + 16 * B * H * H + 4 * B * L * H),
        transcendentals=int(B * (v_pad + L + 5 * H)),
        bytes_accessed=int(H * v_pad * 2 + v_pad * 4 + B * L * H * 2
                           + 8 * H * H * 2 + B * v_pad * 4 + 4 * B * H * 4),
    )

    out_pad, hid = pl.pallas_call(
        attn_decoder_kernel,
        out_shape=(
            jax.ShapeDtypeStruct((B, v_pad), jnp.float32),
            jax.ShapeDtypeStruct((B, H), jnp.float32),
        ),
        grid_spec=pltpu.PrefetchScalarGridSpec(
            num_scalar_prefetch=0,
            grid=(n_tiles,),
            in_specs=[
                pl.BlockSpec((B, H), const2),                     # x (embedded input)
                pl.BlockSpec((B, H), const2),                     # h0
                pl.BlockSpec((B, L, H), const3),                  # encoder outputs (bf16)
                pl.BlockSpec((H, 3 * H), const2),                 # W_ih  (bf16)
                pl.BlockSpec((H, 3 * H), const2),                 # W_hh  (bf16)
                pl.BlockSpec((1, 4 * H), const2),                 # packed GRU bias
                pl.BlockSpec((H, H), const2),                     # W_cat (rnn_output half)
                pl.BlockSpec((H, H), const2),                     # W_cat (context half)
                pl.BlockSpec((1, H), const2),                     # b_cat
                pl.BlockSpec((H, tile_v), lambda j: (0, j)),      # W_out tile (streamed)
                pl.BlockSpec((1, tile_v), lambda j: (0, j)),      # b_out tile
            ],
            out_specs=(
                pl.BlockSpec((B, v_pad), const2),                 # probs (resident row)
                pl.BlockSpec((B, H), const2),                     # new hidden
            ),
            scratch_shapes=[pltpu.VMEM((B, H), jnp.bfloat16)],    # concat_output
        ),
        compiler_params=pltpu.CompilerParams(
            # TODO(synk): v7x megacore -- split the vocab stream across both TCs.
            dimension_semantics=("arbitrary",),
            vmem_limit_bytes=vmem_limit,
        ),
        cost_estimate=cost,
        input_output_aliases={1: 1},                              # h0 buffer -> new hidden
    )(
        emb, h0, enc,
        prep["w_ih"], prep["w_hh"], prep["b_gates"],
        prep["w_cat_h"], prep["w_cat_c"], prep["b_cat"],
        prep["w_out"], prep["b_out"],
    )
    return out_pad[:, :V], hid[None]                              # (B, V), (1, B, H)


# ------------------------------------------------------------------------- reference

def reference_forward(params, input_step, last_hidden, encoder_outputs):
    """Pure-JAX reference mirroring the PyTorch module (eval mode) with the same bf16
    weight / matmul-input rounding the kernel uses (f32 accumulation everywhere)."""
    f32 = jnp.float32
    bf = lambda a: a.astype(jnp.bfloat16)
    H = params["b_cat"].shape[1]

    emb = params["embedding"][input_step[0]]              # (B, H)
    h = last_hidden[0]                                    # (B, H)
    gi = jnp.dot(bf(emb), params["w_ih"], preferred_element_type=f32) + params["b_ih"]
    gh = jnp.dot(bf(h), params["w_hh"], preferred_element_type=f32) + params["b_hh"]
    r = jax.nn.sigmoid(gi[:, :H] + gh[:, :H])
    z = jax.nn.sigmoid(gi[:, H:2 * H] + gh[:, H:2 * H])
    n = jnp.tanh(gi[:, 2 * H:] + r * gh[:, 2 * H:])
    h_new = (1.0 - z) * n + z * h                         # (B, H)

    enc = jnp.transpose(encoder_outputs, (1, 0, 2))       # (B, L, H)
    energies = jnp.einsum("bh,blh->bl", bf(h_new), bf(enc), preferred_element_type=f32)
    attn = jax.nn.softmax(energies, axis=1)               # (B, L)
    context = jnp.einsum("bl,blh->bh", bf(attn), bf(enc), preferred_element_type=f32)

    cat = bf(jnp.concatenate([h_new, context], axis=1))   # (B, 2H)
    concat_out = jnp.tanh(jnp.dot(cat, params["w_cat"], preferred_element_type=f32)
                          + params["b_cat"])
    logits = jnp.dot(bf(concat_out), params["w_out"],
                     preferred_element_type=f32) + params["b_out"]
    out = jax.nn.softmax(logits, axis=1)
    return out, h_new[None]


# ------------------------------------------------------------------------------ main

if __name__ == "__main__":
    B, H, L, V = 2, 32, 8, 64   # batch, hidden_size, encoder seq len, output_size (vocab)

    key = jax.random.PRNGKey(0)
    kp, k1, k2, k3 = jax.random.split(key, 4)
    params = make_params(kp, H, V)

    input_step = jax.random.randint(k1, (1, B), 0, V, dtype=jnp.int32)       # (1, B)
    last_hidden = jax.random.normal(k2, (1, B, H), jnp.float32)               # (1, B, H)
    encoder_outputs = jax.random.normal(k3, (L, B, H), jnp.float32)           # (L, B, H)

    # Compute the reference first (the kernel aliases / reuses the hidden-state buffer).
    ref_out, ref_hid = reference_forward(params, input_step, last_hidden, encoder_outputs)
    jax.block_until_ready((ref_out, ref_hid))

    # One-time prep: tiling choice + weight packing/padding, reused across decode steps.
    tile_v, v_pad, vmem_limit = select_vocab_tiling(B, H, L, V)
    prep = prepare_decoder_params(params, tile_v, v_pad)

    fwd = jax.jit(functools.partial(attn_decoder_forward,
                                    tile_v=tile_v, v_pad=v_pad, vmem_limit=vmem_limit))
    out, hid = fwd(prep, input_step, last_hidden, encoder_outputs)
    jax.block_until_ready((out, hid))

    assert out.shape == (B, V) and hid.shape == (1, B, H)
    # Hidden state has no approx-reciprocal on its path -> tight tolerance.
    np.testing.assert_allclose(np.asarray(hid), np.asarray(ref_hid), rtol=1e-3, atol=1e-3)
    # Probabilities: bf16-matched reference; extra slack only for the EUP approx recips.
    np.testing.assert_allclose(np.asarray(out), np.asarray(ref_out), rtol=1e-2, atol=1e-3)

    print("KERNEL_OK")
</pallas_src>

<mosaic_0001>
module attributes {stable_mosaic.version = 11 : i64} {
  func.func @attn_decoder_kernel(%arg0: i32, %arg1: memref<2x32xf32, #tpu.memory_space<vmem>>, %arg2: memref<2x32xf32, #tpu.memory_space<vmem>>, %arg3: memref<2x8x32xbf16, #tpu.memory_space<vmem>>, %arg4: memref<32x96xbf16, #tpu.memory_space<vmem>>, %arg5: memref<32x96xbf16, #tpu.memory_space<vmem>>, %arg6: memref<1x128xf32, #tpu.memory_space<vmem>>, %arg7: memref<32x32xbf16, #tpu.memory_space<vmem>>, %arg8: memref<32x32xbf16, #tpu.memory_space<vmem>>, %arg9: memref<1x32xf32, #tpu.memory_space<vmem>>, %arg10: memref<32x128xbf16, #tpu.memory_space<vmem>>, %arg11: memref<1x128xf32, #tpu.memory_space<vmem>>, %arg12: memref<2x128xf32, #tpu.memory_space<vmem>>, %arg13: memref<2x32xf32, #tpu.memory_space<vmem>>, %arg14: memref<2x32xbf16, #tpu.memory_space<vmem>>) attributes {dimension_semantics = [#tpu.dimension_semantics<arbitrary>], iteration_bounds = array<i64: 1>, scalar_prefetch = 0 : i64, scratch_operands = 1 : i64, tpu.core_type = #tpu.core_type<tc>, window_params = [{pipeline_mode = #tpu.pipeline_mode<synchronous>, transform_indices = @transform_0, window_bounds = array<i64: 2, 32>}, {pipeline_mode = #tpu.pipeline_mode<synchronous>, transform_indices = @transform_1, window_bounds = array<i64: 2, 32>}, {pipeline_mode = #tpu.pipeline_mode<synchronous>, transform_indices = @transform_2, window_bounds = array<i64: 2, 8, 32>}, {pipeline_mode = #tpu.pipeline_mode<synchronous>, transform_indices = @transform_3, window_bounds = array<i64: 32, 96>}, {pipeline_mode = #tpu.pipeline_mode<synchronous>, transform_indices = @transform_4, window_bounds = array<i64: 32, 96>}, {pipeline_mode = #tpu.pipeline_mode<synchronous>, transform_indices = @transform_5, window_bounds = array<i64: 1, 128>}, {pipeline_mode = #tpu.pipeline_mode<synchronous>, transform_indices = @transform_6, window_bounds = array<i64: 32, 32>}, {pipeline_mode = #tpu.pipeline_mode<synchronous>, transform_indices = @transform_7, window_bounds = array<i64: 32, 32>}, {pipeline_mode = #tpu.pipeline_mode<synchronous>, transform_indices = @transform_8, window_bounds = array<i64: 1, 32>}, {transform_indices = @transform_9, window_bounds = array<i64: 32, 128>}, {transform_indices = @transform_10, window_bounds = array<i64: 1, 128>}, {pipeline_mode = #tpu.pipeline_mode<synchronous>, transform_indices = @transform_11, window_bounds = array<i64: 2, 128>}, {pipeline_mode = #tpu.pipeline_mode<synchronous>, transform_indices = @transform_12, window_bounds = array<i64: 2, 32>}]} {
    %c0_i32 = arith.constant 0 : i32
    %0 = arith.cmpi eq, %arg0, %c0_i32 : i32
    %1 = arith.extui %0 : i1 to i32
    %c0_i32_0 = arith.constant 0 : i32
    %2 = arith.cmpi ne, %1, %c0_i32_0 : i32
    scf.if %2 {
      %c0_9 = arith.constant 0 : index
      %c0_10 = arith.constant 0 : index
      %16 = vector.load %arg1[%c0_9, %c0_10] : memref<2x32xf32, #tpu.memory_space<vmem>>, vector<2x32xf32>
      %c0_11 = arith.constant 0 : index
      %c0_12 = arith.constant 0 : index
      %17 = vector.load %arg2[%c0_11, %c0_12] : memref<2x32xf32, #tpu.memory_space<vmem>>, vector<2x32xf32>
      %c0_13 = arith.constant 0 : index
      %c0_14 = arith.constant 0 : index
      %18 = vector.load %arg6[%c0_13, %c0_14] : memref<1x128xf32, #tpu.memory_space<vmem>>, vector<1x128xf32>
      %19 = arith.truncf %16 : vector<2x32xf32> to vector<2x32xbf16>
      %c0_15 = arith.constant 0 : index
      %c0_16 = arith.constant 0 : index
      %20 = vector.load %arg4[%c0_15, %c0_16] : memref<32x96xbf16, #tpu.memory_space<vmem>>, vector<32x96xbf16>
      %cst_17 = arith.constant dense<0.000000e+00> : vector<2x96xf32>
      %21 = tpu.matmul %19, %20, %cst_17 {dimension_numbers = #tpu.dot_dimension_numbers<[1], [0], [0], [1], [0, 0, 1, 1], [], []>} : vector<2x32xbf16>, vector<32x96xbf16>, vector<2x96xf32> -> vector<2x96xf32>
      %22 = arith.truncf %17 : vector<2x32xf32> to vector<2x32xbf16>
      %c0_18 = arith.constant 0 : index
      %c0_19 = arith.constant 0 : index
      %23 = vector.load %arg5[%c0_18, %c0_19] : memref<32x96xbf16, #tpu.memory_space<vmem>>, vector<32x96xbf16>
      %cst_20 = arith.constant dense<0.000000e+00> : vector<2x96xf32>
      %24 = tpu.matmul %22, %23, %cst_20 {dimension_numbers = #tpu.dot_dimension_numbers<[1], [0], [0], [1], [0, 0, 1, 1], [], []>} : vector<2x32xbf16>, vector<32x96xbf16>, vector<2x96xf32> -> vector<2x96xf32>
      %25 = vector.extract_strided_slice %21 {offsets = [0, 0], sizes = [2, 64], strides = [1, 1]} : vector<2x96xf32> to vector<2x64xf32>
      %26 = vector.extract_strided_slice %24 {offsets = [0, 0], sizes = [2, 64], strides = [1, 1]} : vector<2x96xf32> to vector<2x64xf32>
      %27 = arith.addf %25, %26 : vector<2x64xf32>
      %28 = vector.extract_strided_slice %18 {offsets = [0, 0], sizes = [1, 64], strides = [1, 1]} : vector<1x128xf32> to vector<1x64xf32>
      %29 = vector.broadcast %28 : vector<1x64xf32> to vector<2x64xf32>
      %30 = arith.addf %27, %29 : vector<2x64xf32>
      %31 = arith.negf %30 : vector<2x64xf32>
      %32 = math.exp %31 : vector<2x64xf32>
      %cst_21 = arith.constant 1.000000e+00 : f32
      %33 = vector.broadcast %cst_21 : f32 to vector<2x64xf32>
      %34 = arith.addf %33, %32 : vector<2x64xf32>
      %35 = arith.divf %33, %34 : vector<2x64xf32>
      %36 = vector.extract_strided_slice %35 {offsets = [0, 0], sizes = [2, 32], strides = [1, 1]} : vector<2x64xf32> to vector<2x32xf32>
      %37 = vector.extract_strided_slice %35 {offsets = [0, 32], sizes = [2, 32], strides = [1, 1]} : vector<2x64xf32> to vector<2x32xf32>
      %38 = vector.extract_strided_slice %21 {offsets = [0, 64], sizes = [2, 32], strides = [1, 1]} : vector<2x96xf32> to vector<2x32xf32>
      %39 = vector.extract_strided_slice %18 {offsets = [0, 64], sizes = [1, 32], strides = [1, 1]} : vector<1x128xf32> to vector<1x32xf32>
      %40 = vector.broadcast %39 : vector<1x32xf32> to vector<2x32xf32>
      %41 = arith.addf %38, %40 : vector<2x32xf32>
      %42 = vector.extract_strided_slice %24 {offsets = [0, 64], sizes = [2, 32], strides = [1, 1]} : vector<2x96xf32> to vector<2x32xf32>
      %43 = vector.extract_strided_slice %18 {offsets = [0, 96], sizes = [1, 32], strides = [1, 1]} : vector<1x128xf32> to vector<1x32xf32>
      %44 = vector.broadcast %43 : vector<1x32xf32> to vector<2x32xf32>
      %45 = arith.addf %42, %44 : vector<2x32xf32>
      %46 = arith.mulf %36, %45 : vector<2x32xf32>
      %47 = arith.addf %41, %46 : vector<2x32xf32>
      %48 = math.tanh %47 : vector<2x32xf32>
      %cst_22 = arith.constant 1.000000e+00 : f32
      %49 = vector.broadcast %cst_22 : f32 to vector<2x32xf32>
      %50 = arith.subf %49, %37 : vector<2x32xf32>
      %51 = arith.mulf %50, %48 : vector<2x32xf32>
      %52 = arith.mulf %37, %17 : vector<2x32xf32>
      %53 = arith.addf %51, %52 : vector<2x32xf32>
      %c0_23 = arith.constant 0 : index
      %c0_24 = arith.constant 0 : index
      %54 = vector.load %arg13[%c0_23, %c0_24] : memref<2x32xf32, #tpu.memory_space<vmem>>, vector<2x32xf32>
      tpu.vector_store %arg13[%c0_23, %c0_24], %53 {strides = array<i32>} : memref<2x32xf32, #tpu.memory_space<vmem>>, vector<2x32xf32>,
      %c0_25 = arith.constant 0 : index
      %c0_26 = arith.constant 0 : index
      %c0_27 = arith.constant 0 : index
      %55 = vector.load %arg3[%c0_25, %c0_26, %c0_27] : memref<2x8x32xbf16, #tpu.memory_space<vmem>>, vector<2x8x32xbf16>
      %56 = arith.truncf %53 : vector<2x32xf32> to vector<2x32xbf16>
      %57 = vector.shape_cast %56 : vector<2x32xbf16> to vector<2x1x32xbf16>
      "tpu.trace_start"() <{level = 10 : i32, message = "bqh,blh->bql"}> : () -> ()
      %cst_28 = arith.constant dense<0.000000e+00> : vector<2x1x8xf32>
      %58 = tpu.matmul %57, %55, %cst_28 {dimension_numbers = #tpu.dot_dimension_numbers<[2], [2], [1], [1], [0, 0, 0, 1, 1, 1], [0], [0]>} : vector<2x1x32xbf16>, vector<2x8x32xbf16>, vector<2x1x8xf32> -> vector<2x1x8xf32>
      "tpu.trace_stop"() : () -> ()
      %59 = vector.shape_cast %58 : vector<2x1x8xf32> to vector<2x8xf32>
      %cst_29 = arith.constant dense<0xFF800000> : vector<2xf32>
      %60 = vector.multi_reduction <maximumf>, %59, %cst_29 [1] : vector<2x8xf32> to vector<2xf32>
      %61 = vector.shape_cast %60 : vector<2xf32> to vector<2x1xf32>
      %62 = vector.broadcast %61 : vector<2x1xf32> to vector<2x8xf32>
      %63 = arith.subf %59, %62 : vector<2x8xf32>
      %64 = math.exp %63 : vector<2x8xf32>
      %cst_30 = arith.constant dense<0.000000e+00> : vector<2xf32>
      %65 = vector.multi_reduction <add>, %64, %cst_30 [1] : vector<2x8xf32> to vector<2xf32>
      %66 = vector.shape_cast %65 : vector<2xf32> to vector<2x1xf32>
      %67 = tpu.reciprocal %66 {approx = true} : vector<2x1xf32> -> vector<2x1xf32>
      %68 = vector.broadcast %67 : vector<2x1xf32> to vector<2x8xf32>
      %69 = arith.mulf %64, %68 : vector<2x8xf32>
      %70 = arith.truncf %69 : vector<2x8xf32> to vector<2x8xbf16>
      %71 = vector.shape_cast %70 : vector<2x8xbf16> to vector<2x1x8xbf16>
      "tpu.trace_start"() <{level = 10 : i32, message = "bql,blh->bqh"}> : () -> ()
      %cst_31 = arith.constant dense<0.000000e+00> : vector<2x1x32xf32>
      %72 = tpu.matmul %71, %55, %cst_31 {dimension_numbers = #tpu.dot_dimension_numbers<[2], [1], [1], [2], [0, 0, 0, 1, 1, 2], [0], [0]>} : vector<2x1x8xbf16>, vector<2x8x32xbf16>, vector<2x1x32xf32> -> vector<2x1x32xf32>
      "tpu.trace_stop"() : () -> ()
      %73 = vector.shape_cast %72 : vector<2x1x32xf32> to vector<2x32xf32>
      %74 = arith.truncf %53 : vector<2x32xf32> to vector<2x32xbf16>
      %c0_32 = arith.constant 0 : index
      %c0_33 = arith.constant 0 : index
      %75 = vector.load %arg7[%c0_32, %c0_33] : memref<32x32xbf16, #tpu.memory_space<vmem>>, vector<32x32xbf16>
      %cst_34 = arith.constant dense<0.000000e+00> : vector<2x32xf32>
      %76 = tpu.matmul %74, %75, %cst_34 {dimension_numbers = #tpu.dot_dimension_numbers<[1], [0], [0], [1], [0, 0, 1, 1], [], []>} : vector<2x32xbf16>, vector<32x32xbf16>, vector<2x32xf32> -> vector<2x32xf32>
      %77 = arith.truncf %73 : vector<2x32xf32> to vector<2x32xbf16>
      %c0_35 = arith.constant 0 : index
      %c0_36 = arith.constant 0 : index
      %78 = vector.load %arg8[%c0_35, %c0_36] : memref<32x32xbf16, #tpu.memory_space<vmem>>, vector<32x32xbf16>
      %cst_37 = arith.constant dense<0.000000e+00> : vector<2x32xf32>
      %79 = tpu.matmul %77, %78, %cst_37 {dimension_numbers = #tpu.dot_dimension_numbers<[1], [0], [0], [1], [0, 0, 1, 1], [], []>} : vector<2x32xbf16>, vector<32x32xbf16>, vector<2x32xf32> -> vector<2x32xf32>
      %80 = arith.addf %76, %79 : vector<2x32xf32>
      %c0_38 = arith.constant 0 : index
      %c0_39 = arith.constant 0 : index
      %81 = vector.load %arg9[%c0_38, %c0_39] : memref<1x32xf32, #tpu.memory_space<vmem>>, vector<1x32xf32>
      %82 = vector.broadcast %81 : vector<1x32xf32> to vector<2x32xf32>
      %83 = arith.addf %80, %82 : vector<2x32xf32>
      %84 = math.tanh %83 : vector<2x32xf32>
      %85 = arith.truncf %84 : vector<2x32xf32> to vector<2x32xbf16>
      %c0_40 = arith.constant 0 : index
      %c0_41 = arith.constant 0 : index
      %86 = vector.load %arg14[%c0_40, %c0_41] : memref<2x32xbf16, #tpu.memory_space<vmem>>, vector<2x32xbf16>
      tpu.vector_store %arg14[%c0_40, %c0_41], %85 {strides = array<i32>} : memref<2x32xbf16, #tpu.memory_space<vmem>>, vector<2x32xbf16>,
    } else {
    }
    %c0 = arith.constant 0 : index
    %c0_1 = arith.constant 0 : index
    %3 = vector.load %arg14[%c0, %c0_1] : memref<2x32xbf16, #tpu.memory_space<vmem>>, vector<2x32xbf16>
    %c0_2 = arith.constant 0 : index
    %c0_3 = arith.constant 0 : index
    %4 = vector.load %arg10[%c0_2, %c0_3] : memref<32x128xbf16, #tpu.memory_space<vmem>>, vector<32x128xbf16>
    %cst = arith.constant dense<0.000000e+00> : vector<2x128xf32>
    %5 = tpu.matmul %3, %4, %cst {dimension_numbers = #tpu.dot_dimension_numbers<[1], [0], [0], [1], [0, 0, 1, 1], [], []>} : vector<2x32xbf16>, vector<32x128xbf16>, vector<2x128xf32> -> vector<2x128xf32>
    %c0_4 = arith.constant 0 : index
    %c0_5 = arith.constant 0 : index
    %6 = vector.load %arg11[%c0_4, %c0_5] : memref<1x128xf32, #tpu.memory_space<vmem>>, vector<1x128xf32>
    %7 = vector.broadcast %6 : vector<1x128xf32> to vector<2x128xf32>
    %8 = arith.addf %5, %7 : vector<2x128xf32>
    %c128_i32 = arith.constant 128 : i32
    %9 = arith.muli %arg0, %c128_i32 : i32
    %10 = tpu.assume_multiple %9, 128 : i32
    %c0_6 = arith.constant 0 : index
    %11 = arith.index_cast %10 : i32 to index
    %12 = vector.load %arg12[%c0_6, %11] : memref<2x128xf32, #tpu.memory_space<vmem>>, vector<2x128xf32>
    tpu.vector_store %arg12[%c0_6, %11], %8 {strides = array<i32>} : memref<2x128xf32, #tpu.memory_space<vmem>>, vector<2x128xf32>,
    %c0_i32_7 = arith.constant 0 : i32
    %13 = arith.cmpi eq, %arg0, %c0_i32_7 : i32
    %14 = arith.extui %13 : i1 to i32
    %c0_i32_8 = arith.constant 0 : i32
    %15 = arith.cmpi ne, %14, %c0_i32_8 : i32
    scf.if %15 {
      %c0_9 = arith.constant 0 : index
      %c0_10 = arith.constant 0 : index
      %16 = vector.load %arg12[%c0_9, %c0_10] : memref<2x128xf32, #tpu.memory_space<vmem>>, vector<2x128xf32>
      %cst_11 = arith.constant dense<0xFF800000> : vector<2xf32>
      %17 = vector.multi_reduction <maximumf>, %16, %cst_11 [1] : vector<2x128xf32> to vector<2xf32>
      %18 = vector.shape_cast %17 : vector<2xf32> to vector<2x1xf32>
      %19 = vector.broadcast %18 : vector<2x1xf32> to vector<2x128xf32>
      %20 = arith.subf %16, %19 : vector<2x128xf32>
      %21 = math.exp %20 : vector<2x128xf32>
      %cst_12 = arith.constant dense<0.000000e+00> : vector<2xf32>
      %22 = vector.multi_reduction <add>, %21, %cst_12 [1] : vector<2x128xf32> to vector<2xf32>
      %23 = vector.shape_cast %22 : vector<2xf32> to vector<2x1xf32>
      %24 = tpu.reciprocal %23 {approx = true} : vector<2x1xf32> -> vector<2x1xf32>
      %25 = vector.broadcast %24 : vector<2x1xf32> to vector<2x128xf32>
      %26 = arith.mulf %21, %25 : vector<2x128xf32>
      %c0_13 = arith.constant 0 : index
      %c0_14 = arith.constant 0 : index
      %27 = vector.load %arg12[%c0_13, %c0_14] : memref<2x128xf32, #tpu.memory_space<vmem>>, vector<2x128xf32>
      tpu.vector_store %arg12[%c0_13, %c0_14], %26 {strides = array<i32>} : memref<2x128xf32, #tpu.memory_space<vmem>>, vector<2x128xf32>,
    } else {
    }
    return
  }
  func.func @transform_0(%arg0: i32) -> (i32, i32) {
    %c0_i32 = arith.constant 0 : i32
    %c0_i32_0 = arith.constant 0 : i32
    %c0_i32_1 = arith.constant 0 : i32
    return %c0_i32, %c0_i32_0 : i32, i32
  }
  func.func @transform_1(%arg0: i32) -> (i32, i32) {
    %c0_i32 = arith.constant 0 : i32
    %c0_i32_0 = arith.constant 0 : i32
    %c0_i32_1 = arith.constant 0 : i32
    return %c0_i32, %c0_i32_0 : i32, i32
  }
  func.func @transform_2(%arg0: i32) -> (i32, i32, i32) {
    %c0_i32 = arith.constant 0 : i32
    %c0_i32_0 = arith.constant 0 : i32
    %c0_i32_1 = arith.constant 0 : i32
    %c0_i32_2 = arith.constant 0 : i32
    return %c0_i32, %c0_i32_0, %c0_i32_1 : i32, i32, i32
  }
  func.func @transform_3(%arg0: i32) -> (i32, i32) {
    %c0_i32 = arith.constant 0 : i32
    %c0_i32_0 = arith.constant 0 : i32
    %c0_i32_1 = arith.constant 0 : i32
    return %c0_i32, %c0_i32_0 : i32, i32
  }
  func.func @transform_4(%arg0: i32) -> (i32, i32) {
    %c0_i32 = arith.constant 0 : i32
    %c0_i32_0 = arith.constant 0 : i32
    %c0_i32_1 = arith.constant 0 : i32
    return %c0_i32, %c0_i32_0 : i32, i32
  }
  func.func @transform_5(%arg0: i32) -> (i32, i32) {
    %c0_i32 = arith.constant 0 : i32
    %c0_i32_0 = arith.constant 0 : i32
    %c0_i32_1 = arith.constant 0 : i32
    return %c0_i32, %c0_i32_0 : i32, i32
  }
  func.func @transform_6(%arg0: i32) -> (i32, i32) {
    %c0_i32 = arith.constant 0 : i32
    %c0_i32_0 = arith.constant 0 : i32
    %c0_i32_1 = arith.constant 0 : i32
    return %c0_i32, %c0_i32_0 : i32, i32
  }
  func.func @transform_7(%arg0: i32) -> (i32, i32) {
    %c0_i32 = arith.constant 0 : i32
    %c0_i32_0 = arith.constant 0 : i32
    %c0_i32_1 = arith.constant 0 : i32
    return %c0_i32, %c0_i32_0 : i32, i32
  }
  func.func @transform_8(%arg0: i32) -> (i32, i32) {
    %c0_i32 = arith.constant 0 : i32
    %c0_i32_0 = arith.constant 0 : i32
    %c0_i32_1 = arith.constant 0 : i32
    return %c0_i32, %c0_i32_0 : i32, i32
  }
  func.func @transform_9(%arg0: i32) -> (i32, i32) {
    %c0_i32 = arith.constant 0 : i32
    %c0_i32_0 = arith.constant 0 : i32
    return %c0_i32, %arg0 : i32, i32
  }
  func.func @transform_10(%arg0: i32) -> (i32, i32) {
    %c0_i32 = arith.constant 0 : i32
    %c0_i32_0 = arith.constant 0 : i32
    return %c0_i32, %arg0 : i32, i32
  }
  func.func @transform_11(%arg0: i32) -> (i32, i32) {
    %c0_i32 = arith.constant 0 : i32
    %c0_i32_0 = arith.constant 0 : i32
    %c0_i32_1 = arith.constant 0 : i32
    return %c0_i32, %c0_i32_0 : i32, i32
  }
  func.func @transform_12(%arg0: i32) -> (i32, i32) {
    %c0_i32 = arith.constant 0 : i32
    %c0_i32_0 = arith.constant 0 : i32
    %c0_i32_1 = arith.constant 0 : i32
    return %c0_i32, %c0_i32_0 : i32, i32
  }
}

</mosaic_0001>

<llo_original>
// kernel: attn_decoder_forward.1
$region0: #{attn_decoder_forward.1}
  #allocation0 [shape = 'u32[]', space=smem, size = 0x4, offset = 0x4, fixed_abs, tag = 'smem constant byte address 0x4 - core index']
  #allocation1 [shape = 'u32[144,128]{1,0:T(1,128)}', space=vmem, size = 0x12000, scoped, tag = 'internal scratch']
  #allocation2 [shape = 'bf16[2,32]{1,0:T(2,128)(2,1)}', space=vmem, size = 0x200, scoped, tag = 'scratch operand']
  %s0 = inlined_call_operand.vmem [shape: f32[2,32], index: 0, kind: input, shape index: {}]
  %s1 = inlined_call_operand.vmem [shape: f32[2,32], index: 1, kind: input, shape index: {}, may-alias: {1,12}]
  %s2 = inlined_call_operand.vmem [shape: bf16[2,8,32], index: 2, kind: input, shape index: {}]
  %s3 = inlined_call_operand.vmem [shape: bf16[32,96], index: 3, kind: input, shape index: {}]
  %s4 = inlined_call_operand.vmem [shape: bf16[32,96], index: 4, kind: input, shape index: {}]
  %s5 = inlined_call_operand.vmem [shape: f32[1,128], index: 5, kind: input, shape index: {}]
  %s6 = inlined_call_operand.vmem [shape: bf16[32,32], index: 6, kind: input, shape index: {}]
  %s7 = inlined_call_operand.vmem [shape: bf16[32,32], index: 7, kind: input, shape index: {}]
  %s8 = inlined_call_operand.vmem [shape: f32[1,32], index: 8, kind: input, shape index: {}]
  %s9 = inlined_call_operand.vmem [shape: bf16[32,128], index: 9, kind: input, shape index: {}]
  %s10 = inlined_call_operand.vmem [shape: f32[1,128], index: 10, kind: input, shape index: {}]
  %s11 = inlined_call_operand.hbm [shape: f32[2,128], index: 11, kind: output, shape index: {0}]
  %s12 = inlined_call_operand.vmem [shape: f32[2,32], index: 12, kind: output, shape index: {1}, may-alias: {1,12}]
  %13 = xla_tuple %s11, %s12
  %s14 = sld [smem:[#allocation0]]
  $region70: #{attn_decoder_forward.1} parent=0
    _
  %s16 = ssub.s32 1, %s14
  %s17 = scalar_select 0, %s16, %s14
  $region1: #{attn_decoder_forward.1} parent=0
    #allocation3 [shape = 'u8[1024]{0}', space=vmem, size = 0x400, scoped, tag = 'output window, operand 0, single buffered']
    #allocation4 [shape = 's32[1]{0}', space=sflag, size = 0x4, scoped, tag = 'scoped memory for attn_decoder_forward.1']
    %18 = vsyncpa [#allocation4], 0
    // Predicated region
    $region2: #{attn_decoder_forward.1} parent=1 // pred_check
      _
    $region3: #{attn_decoder_forward.1} parent=1 // pred_check_branch
      %20 = sbr.rel (0) target = $region5
    $region4: #{attn_decoder_forward.1} parent=1 // pred_region
      _
    $region5: #{attn_decoder_forward.1} parent=1 // pred_fallthru
      _
    // Predicated region
    $region6: #{attn_decoder_forward.1} parent=1 // pred_check
      _
    $region7: #{attn_decoder_forward.1} parent=1 // pred_check_branch
      %22 = sbr.rel (0) target = $region9
    $region8: #{attn_decoder_forward.1} parent=1 // pred_region
      _
    $region9: #{attn_decoder_forward.1} parent=1 // pred_fallthru
      _
    // Predicated region
    $region10: #{attn_decoder_forward.1} parent=1 // pred_check
      _
    $region11: #{attn_decoder_forward.1} parent=1 // pred_check_branch
      %24 = sbr.rel (0) target = $region13
    $region12: #{attn_decoder_forward.1} parent=1 // pred_region
      _
    $region13: #{attn_decoder_forward.1} parent=1 // pred_fallthru
      _
    // Predicated region
    $region14: #{attn_decoder_forward.1} parent=1 // pred_check
      _
    $region15: #{attn_decoder_forward.1} parent=1 // pred_check_branch
      %26 = sbr.rel (0) target = $region17
    $region16: #{attn_decoder_forward.1} parent=1 // pred_region
      _
    $region17: #{attn_decoder_forward.1} parent=1 // pred_fallthru
      _
    // Predicated region
    $region18: #{attn_decoder_forward.1} parent=1 // pred_check
      _
    $region19: #{attn_decoder_forward.1} parent=1 // pred_check_branch
      %28 = sbr.rel (0) target = $region21
    $region20: #{attn_decoder_forward.1} parent=1 // pred_region
      _
    $region21: #{attn_decoder_forward.1} parent=1 // pred_fallthru
      _
    // Predicated region
    $region22: #{attn_decoder_forward.1} parent=1 // pred_check
      _
    $region23: #{attn_decoder_forward.1} parent=1 // pred_check_branch
      %30 = sbr.rel (0) target = $region25
    $region24: #{attn_decoder_forward.1} parent=1 // pred_region
      _
    $region25: #{attn_decoder_forward.1} parent=1 // pred_fallthru
      _
    // Predicated region
    $region26: #{attn_decoder_forward.1} parent=1 // pred_check
      _
    $region27: #{attn_decoder_forward.1} parent=1 // pred_check_branch
      %32 = sbr.rel (0) target = $region29
    $region28: #{attn_decoder_forward.1} parent=1 // pred_region
      _
    $region29: #{attn_decoder_forward.1} parent=1 // pred_fallthru
      _
    // Predicated region
    $region30: #{attn_decoder_forward.1} parent=1 // pred_check
      _
    $region31: #{attn_decoder_forward.1} parent=1 // pred_check_branch
      %34 = sbr.rel (0) target = $region33
    $region32: #{attn_decoder_forward.1} parent=1 // pred_region
      _
    $region33: #{attn_decoder_forward.1} parent=1 // pred_fallthru
      _
    // Predicated region
    $region34: #{attn_decoder_forward.1} parent=1 // pred_check
      _
    $region35: #{attn_decoder_forward.1} parent=1 // pred_check_branch
      %36 = sbr.rel (0) target = $region37
    $region36: #{attn_decoder_forward.1} parent=1 // pred_region
      _
    $region37: #{attn_decoder_forward.1} parent=1 // pred_fallthru
      _
    // Predicated region
    $region38: #{attn_decoder_forward.1} parent=1 // pred_check
      _
    $region39: #{attn_decoder_forward.1} parent=1 // pred_check_branch
      %38 = sbr.rel (0) target = $region41
    $region40: #{attn_decoder_forward.1} parent=1 // pred_region
      _
    $region41: #{attn_decoder_forward.1} parent=1 // pred_fallthru
      _
    // Predicated region
    $region42: #{attn_decoder_forward.1} parent=1 // pred_check
      _
    $region43: #{attn_decoder_forward.1} parent=1 // pred_check_branch
      %40 = sbr.rel (0) target = $region45
    $region44: #{attn_decoder_forward.1} parent=1 // pred_region
      _
    $region45: #{attn_decoder_forward.1} parent=1 // pred_fallthru
      _
    %p42 = scmp.eq.s32.totalorder 0, 0
    // Predicated region
    $region46: #{attn_decoder_forward.1} parent=1 // pred_check
      %p43 = pneg %p42
    $region47: #{attn_decoder_forward.1} parent=1 // pred_check_branch
      %45 = sbr.rel (%p43) target = $region49
    $region48: #{attn_decoder_forward.1} parent=1 // pred_region
      %v46 = vld [vmem:[%s0] sm:$0x3]
      %v47 = vld [vmem:[%s1] sm:$0x3]
      %v48 = vld [vmem:[%s5] sm:$0x1]
      %v49 = vpack.c.bf16 %v46, %v46
      %v50 = vld [vmem:[%s3] sm:$0xf]
      %v51 = vld [vmem:[%s3 + $0x4] sm:$0xf]
      %v52 = vld [vmem:[%s3 + $0x8] sm:$0xf]
      %v53 = vld [vmem:[%s3 + $0xc] sm:$0xf]
      %v58 = vunpack.c.l.b16 %v50
      %v59 = vunpack.c.l.b16 %v51
      %v60 = vunpack.c.l.b16 %v52
      %v61 = vunpack.c.l.b16 %v53
      %v62 = vpack.c.b16 %v59, %v58
      %v63 = vpack.c.b16 %v61, %v60
      %vm66 = vcmask 261120
      %v68 = vsel %vm66, %v49, 0
      %70 = vmatprep.subr.bf16.mxu0 0
      %71 = vmatpush1.bf16.msra.mxu0 0
      %72 = vmatprep.subr.bf16.mxu0 0
      %73 = vmatpush1.bf16.msra.mxu0 0
      %74 = vmatprep.subr.bf16.mxu0 0
      %75 = vmatpush1.bf16.msra.mxu0 0
      %76 = vmatprep.subr.bf16.mxu0 0
      %77 = vmatpush1.bf16.msra.mxu0 0
      %78 = vmatprep.subr.bf16.mxu0 0
      %79 = vmatpush1.bf16.msra.mxu0 0
      %80 = vmatprep.subr.bf16.mxu0 0
      %81 = vmatpush1.bf16.msra.mxu0 0
      %82 = vmatprep.subr.bf16.mxu0 0
      %83 = vmatpush1.bf16.msra.mxu0 %v63
      %84 = vmatprep.subr.bf16.mxu0 0
      %85 = vmatpush1.bf16.msra.mxu0 %v62
      %86 = vmatprep.subr.bf16.mxu0 0
      %87 = vmatpush2.bf16.msra.mxu0 0
      %88 = vmatprep.subr.bf16.mxu0 0
      %89 = vmatpush2.bf16.msra.mxu0 0
      %90 = vmatprep.subr.bf16.mxu0 0
      %91 = vmatpush2.bf16.msra.mxu0 0
      %92 = vmatprep.subr.bf16.mxu0 0
      %93 = vmatpush2.bf16.msra.mxu0 0
      %94 = vmatprep.subr.bf16.mxu0 0
      %95 = vmatpush2.bf16.msra.mxu0 0
      %96 = vmatprep.subr.bf16.mxu0 0
      %97 = vmatpush2.bf16.msra.mxu0 0
      %98 = vmatprep.subr.bf16.mxu0 0
      %99 = vmatpush2.bf16.msra.mxu0 0
      %100 = vmatprep.subr.bf16.mxu0 0
      %101 = vmatpush2.bf16.msra.mxu0 0
      %102 = vmatprep.mubr.bf16.mxu0 0
      %103 = vmatmul.mubr.bf16.gmra.mxu0 %v68
      %v104 = vpop.f32.mrf.mxu0
      %v105 = vadd.f32 0.0, %v104
      %v106 = vpop.f32.mrf.mxu0
      %v107 = vpop.f32.mrf.mxu0
      %v108 = vpop.f32.mrf.mxu0
      %109 = vdwg.mxu0
      %v110 = vpack.c.bf16 %v47, %v47
      %v111 = vld [vmem:[%s4] sm:$0xf]
      %v112 = vld [vmem:[%s4 + $0x4] sm:$0xf]
      %v113 = vld [vmem:[%s4 + $0x8] sm:$0xf]
      %v114 = vld [vmem:[%s4 + $0xc] sm:$0xf]
      %v119 = vunpack.c.l.b16 %v111
      %v120 = vunpack.c.l.b16 %v112
      %v121 = vunpack.c.l.b16 %v113
      %v122 = vunpack.c.l.b16 %v114
      %v123 = vpack.c.b16 %v120, %v119
      %v124 = vpack.c.b16 %v122, %v121
      %v128 = vsel %vm66, %v110, 0
      %130 = vmatprep.subr.bf16.mxu0 0
      %131 = vmatpush1.bf16.msra.mxu0 0
      %132 = vmatprep.subr.bf16.mxu0 0
      %133 = vmatpush1.bf16.msra.mxu0 0
      %134 = vmatprep.subr.bf16.mxu0 0
      %135 = vmatpush1.bf16.msra.mxu0 0
      %136 = vmatprep.subr.bf16.mxu0 0
      %137 = vmatpush1.bf16.msra.mxu0 0
      %138 = vmatprep.subr.bf16.mxu0 0
      %139 = vmatpush1.bf16.msra.mxu0 0
      %140 = vmatprep.subr.bf16.mxu0 0
      %141 = vmatpush1.bf16.msra.mxu0 0
      %142 = vmatprep.subr.bf16.mxu0 0
      %143 = vmatpush1.bf16.msra.mxu0 %v124
      %144 = vmatprep.subr.bf16.mxu0 0
      %145 = vmatpush1.bf16.msra.mxu0 %v123
      %146 = vmatprep.subr.bf16.mxu0 0
      %147 = vmatpush2.bf16.msra.mxu0 0
      %148 = vmatprep.subr.bf16.mxu0 0
      %149 = vmatpush2.bf16.msra.mxu0 0
      %150 = vmatprep.subr.bf16.mxu0 0
      %151 = vmatpush2.bf16.msra.mxu0 0
      %152 = vmatprep.subr.bf16.mxu0 0
      %153 = vmatpush2.bf16.msra.mxu0 0
      %154 = vmatprep.subr.bf16.mxu0 0
      %155 = vmatpush2.bf16.msra.mxu0 0
      %156 = vmatprep.subr.bf16.mxu0 0
      %157 = vmatpush2.bf16.msra.mxu0 0
      %158 = vmatprep.subr.bf16.mxu0 0
      %159 = vmatpush2.bf16.msra.mxu0 0
      %160 = vmatprep.subr.bf16.mxu0 0
      %161 = vmatpush2.bf16.msra.mxu0 0
      %162 = vmatprep.mubr.bf16.mxu0 0
      %163 = vmatmul.mubr.bf16.gmra.mxu0 %v128
      %v164 = vpop.f32.mrf.mxu0
      %v165 = vadd.f32 0.0, %v164
      %v166 = vpop.f32.mrf.mxu0
      %v167 = vpop.f32.mrf.mxu0
      %v168 = vpop.f32.mrf.mxu0
      %169 = vdwg.mxu0
      %v170 = vadd.f32 %v105, %v165
      %v172 = vlaneseq
      %v173 = vshrl.u32 %v172, 7
      %v174 = vsub.s32 0, %v173
      %v175 = vrot.slane %v48, %v174
      %v177 = vadd.f32 %v170, %v175
      %v178 = vxor.u32 %v177, 2147483648
      %v179 = vmul.f32 %v178, 1.442695
      %v180 = vpow.pop %v179
      %v181 = vadd.f32 %v180, 1.0
      %v182 = vrcp.pop %v181
      %v183 = vmul.f32 1.0, %v182
      %v184 = vadd.f32 %v105, %v175
      %185 = vrot.lane.b32.xlu0 %v175, 96
      %v186 = vpop.permute.xlu0 %185
      %v188 = vadd.f32 %v165, %v186
      %190 = vrot.lane.b32.xlu0 %v188, 64
      %v191 = vpop.permute.xlu0 %190
      %v193 = vmul.f32 %v183, %v191
      %195 = vrot.lane.b32.xlu0 %v193, 64
      %v196 = vpop.permute.xlu0 %195
      %v198 = vadd.f32 %v184, %v196
      %v199 = vtanh.pop %v198
      %v200 = vsub.f32 1.0, %v183
      %202 = vrot.lane.b32.xlu0 %v199, 96
      %v203 = vpop.permute.xlu0 %202
      %v205 = vmul.f32 %v200, %v203
      %207 = vrot.lane.b32.xlu0 %v47, 32
      %v208 = vpop.permute.xlu0 %207
      %v210 = vmul.f32 %v183, %v208
      %v211 = vadd.f32 %v205, %v210
      %213 = vrot.lane.b32.xlu0 %v211, 96
      %v214 = vpop.permute.xlu0 %213
      %vm216 = vcmask 254976
      %217 = vst.msk [vmem:[%s12] sm:$0x3] %vm216, %v214
      %v218 = vld [vmem:[%s2] sm:$0xf]
      %v219 = vld [vmem:[%s2 + $0x4] sm:$0xf]
      %v220 = vpack.c.bf16 %v211, %v211
      %v223 = vunpack.c.l.s4 1966171168
      %v224 = vunpack.c.0.s8 %v223
      %v225 = vlaneseq
      %v226 = vshrl.u32 %v225, 7
      %v227 = vsub.s32 %v224, %v226
      %v228 = vrot.slane %v220, %v227
      %v230 = vunpack.c.l.s4 1966171168
      %v231 = vunpack.c.0.s8 %v230
      %v232 = vlaneseq
      %v233 = vshrl.u32 %v232, 7
      %v234 = vsub.s32 %v231, %v233
      %v235 = vrot.slane %v228, %v234
      %v236 = vunpack.i.l.s16 %v235
      %v237 = vunpack.i.h.s16 %v235
      %v238 = vpack.i.b16 %v236, %v236
      %v239 = vlaneseq
      %v240 = vshrl.u32 %v239, 7
      %v241 = vsub.s32 0, %v240
      %v242 = vrot.slane %v238, %v241
      %243 = vrot.lane.b32.xlu0 %v242, 96
      %v244 = vpop.permute.xlu0 %243
      %v246 = vsel %vm66, %v244, 0
      %v249 = vsel %vm66, %v218, 0
      %251 = vmatprep.subr.bf16.mxu0 0
      %252 = vmatpush1.bf16.xpose.msra.mxu0 0
      %253 = vmatprep.subr.bf16.mxu0 0
      %254 = vmatpush1.bf16.xpose.msra.mxu0 0
      %255 = vmatprep.subr.bf16.mxu0 0
      %256 = vmatpush1.bf16.xpose.msra.mxu0 0
      %257 = vmatprep.subr.bf16.mxu0 0
      %258 = vmatpush1.bf16.xpose.msra.mxu0 0
      %259 = vmatprep.subr.bf16.mxu0 0
      %260 = vmatpush1.bf16.xpose.msra.mxu0 0
      %261 = vmatprep.subr.bf16.mxu0 0
      %262 = vmatpush1.bf16.xpose.msra.mxu0 0
      %263 = vmatprep.subr.bf16.mxu0 0
      %264 = vmatpush1.bf16.xpose.msra.mxu0 0
      %265 = vmatprep.subr.bf16.mxu0 0
      %266 = vmatpush1.bf16.xpose.msra.mxu0 %v249
      %267 = vmatprep.subr.bf16.mxu0 0
      %268 = vmatpush2.bf16.xpose.msra.mxu0 0
      %269 = vmatprep.subr.bf16.mxu0 0
      %270 = vmatpush2.bf16.xpose.msra.mxu0 0
      %271 = vmatprep.subr.bf16.mxu0 0
      %272 = vmatpush2.bf16.xpose.msra.mxu0 0
      %273 = vmatprep.subr.bf16.mxu0 0
      %274 = vmatpush2.bf16.xpose.msra.mxu0 0
      %275 = vmatprep.subr.bf16.mxu0 0
      %276 = vmatpush2.bf16.xpose.msra.mxu0 0
      %277 = vmatprep.subr.bf16.mxu0 0
      %278 = vmatpush2.bf16.xpose.msra.mxu0 0
      %279 = vmatprep.subr.bf16.mxu0 0
      %280 = vmatpush2.bf16.xpose.msra.mxu0 0
      %281 = vmatprep.subr.bf16.mxu0 0
      %282 = vmatpush2.bf16.xpose.msra.mxu0 0
      %283 = vmatprep.mubr.bf16.mxu0 0
      %284 = vmatmul.mubr.bf16.gmra.mxu0 %v246
      %v285 = vpop.f32.mrf.mxu0
      %v286 = vadd.f32 0.0, %v285
      %v287 = vpop.f32.mrf.mxu0
      %v288 = vpop.f32.mrf.mxu0
      %v289 = vpop.f32.mrf.mxu0
      %290 = vdwg.mxu0
      %v291 = vpack.i.b16 %v237, %v237
      %v292 = vlaneseq
      %v293 = vshrl.u32 %v292, 7
      %v294 = vsub.s32 0, %v293
      %v295 = vrot.slane %v291, %v294
      %296 = vrot.lane.b32.xlu0 %v295, 96
      %v297 = vpop.permute.xlu0 %296
      %v299 = vsel %vm66, %v297, 0
      %v302 = vsel %vm66, %v219, 0
      %304 = vmatprep.subr.bf16.mxu0 0
      %305 = vmatpush1.bf16.xpose.msra.mxu0 0
      %306 = vmatprep.subr.bf16.mxu0 0
      %307 = vmatpush1.bf16.xpose.msra.mxu0 0
      %308 = vmatprep.subr.bf16.mxu0 0
      %309 = vmatpush1.bf16.xpose.msra.mxu0 0
      %310 = vmatprep.subr.bf16.mxu0 0
      %311 = vmatpush1.bf16.xpose.msra.mxu0 0
      %312 = vmatprep.subr.bf16.mxu0 0
      %313 = vmatpush1.bf16.xpose.msra.mxu0 0
      %314 = vmatprep.subr.bf16.mxu0 0
      %315 = vmatpush1.bf16.xpose.msra.mxu0 0
      %316 = vmatprep.subr.bf16.mxu0 0
      %317 = vmatpush1.bf16.xpose.msra.mxu0 0
      %318 = vmatprep.subr.bf16.mxu0 0
      %319 = vmatpush1.bf16.xpose.msra.mxu0 %v302
      %320 = vmatprep.subr.bf16.mxu0 0
      %321 = vmatpush2.bf16.xpose.msra.mxu0 0
      %322 = vmatprep.subr.bf16.mxu0 0
      %323 = vmatpush2.bf16.xpose.msra.mxu0 0
      %324 = vmatprep.subr.bf16.mxu0 0
      %325 = vmatpush2.bf16.xpose.msra.mxu0 0
      %326 = vmatprep.subr.bf16.mxu0 0
      %327 = vmatpush2.bf16.xpose.msra.mxu0 0
      %328 = vmatprep.subr.bf16.mxu0 0
      %329 = vmatpush2.bf16.xpose.msra.mxu0 0
      %330 = vmatprep.subr.bf16.mxu0 0
      %331 = vmatpush2.bf16.xpose.msra.mxu0 0
      %332 = vmatprep.subr.bf16.mxu0 0
      %333 = vmatpush2.bf16.xpose.msra.mxu0 0
      %334 = vmatprep.subr.bf16.mxu0 0
      %335 = vmatpush2.bf16.xpose.msra.mxu0 0
      %336 = vmatprep.mubr.bf16.mxu0 0
      %337 = vmatmul.mubr.bf16.gmra.mxu0 %v299
      %v338 = vpop.f32.mrf.mxu0
      %v339 = vadd.f32 0.0, %v338
      %v340 = vpop.f32.mrf.mxu0
      %v341 = vpop.f32.mrf.mxu0
      %v342 = vpop.f32.mrf.mxu0
      %343 = vdwg.mxu0
      %v346 = vrot.slane %v339, 7
      %vm347 = vcmask 1041409
      %v348 = vsel %vm347, %v346, %v286
      %vm350 = vcmask 58368
      %v351 = vsel %vm350, %v348, -inf
      %352 = vmax.xlane.f32.xlu0 %v351
      %v353 = vpop.xlane.xlu0 %352
      %v355 = vrot.slane %v353, 1
      %v358 = vsub.f32 %v286, %v353
      %v359 = vsub.f32 %v339, %v355
      %v360 = vmul.f32 %v358, 1.442695
      %v361 = vpow.pop %v360
      %v362 = vmul.f32 %v359, 1.442695
      %v363 = vpow.pop %v362
      %v366 = vrot.slane %v363, 7
      %v367 = vsel %vm347, %v366, %v361
      %v369 = vsel %vm350, %v367, 0.0
      %370 = vadd.xlane.f32.xlu0 %v369
      %v371 = vpop.xlane.xlu0 %370
      %v372 = vrcp.pop %v371
      %v374 = vrot.slane %v372, 1
      %v377 = vmul.f32 %v361, %v372
      %v378 = vmul.f32 %v363, %v374
      %v379 = vpack.c.bf16 %v377, %v377
      %v380 = vpack.c.bf16 %v378, %v378
      %vm381 = vcmask 64512
      %v383 = vsel %vm381, %v379, 0
      %vm385 = vcmask 1043456
      %v386 = vsel %vm385, %v218, 0
      %388 = vmatprep.subr.bf16.mxu0 0
      %389 = vmatpush1.bf16.msra.mxu0 0
      %390 = vmatprep.subr.bf16.mxu0 0
      %391 = vmatpush1.bf16.msra.mxu0 0
      %392 = vmatprep.subr.bf16.mxu0 0
      %393 = vmatpush1.bf16.msra.mxu0 0
      %394 = vmatprep.subr.bf16.mxu0 0
      %395 = vmatpush1.bf16.msra.mxu0 0
      %396 = vmatprep.subr.bf16.mxu0 0
      %397 = vmatpush1.bf16.msra.mxu0 0
      %398 = vmatprep.subr.bf16.mxu0 0
      %399 = vmatpush1.bf16.msra.mxu0 0
      %400 = vmatprep.subr.bf16.mxu0 0
      %401 = vmatpush1.bf16.msra.mxu0 0
      %402 = vmatprep.subr.bf16.mxu0 0
      %403 = vmatpush1.bf16.msra.mxu0 %v386
      %404 = vmatprep.subr.bf16.mxu0 0
      %405 = vmatpush2.bf16.msra.mxu0 0
      %406 = vmatprep.subr.bf16.mxu0 0
      %407 = vmatpush2.bf16.msra.mxu0 0
      %408 = vmatprep.subr.bf16.mxu0 0
      %409 = vmatpush2.bf16.msra.mxu0 0
      %410 = vmatprep.subr.bf16.mxu0 0
      %411 = vmatpush2.bf16.msra.mxu0 0
      %412 = vmatprep.subr.bf16.mxu0 0
      %413 = vmatpush2.bf16.msra.mxu0 0
      %414 = vmatprep.subr.bf16.mxu0 0
      %415 = vmatpush2.bf16.msra.mxu0 0
      %416 = vmatprep.subr.bf16.mxu0 0
      %417 = vmatpush2.bf16.msra.mxu0 0
      %418 = vmatprep.subr.bf16.mxu0 0
      %419 = vmatpush2.bf16.msra.mxu0 0
      %420 = vmatprep.mubr.bf16.mxu0 0
      %421 = vmatmul.mubr.bf16.gmra.mxu0 %v383
      %v422 = vpop.f32.mrf.mxu0
      %v423 = vadd.f32 0.0, %v422
      %v424 = vpop.f32.mrf.mxu0
      %v425 = vpop.f32.mrf.mxu0
      %v426 = vpop.f32.mrf.mxu0
      %427 = vdwg.mxu0
      %v429 = vsel %vm381, %v380, 0
      %v431 = vsel %vm385, %v219, 0
      %433 = vmatprep.subr.bf16.mxu0 0
      %434 = vmatpush1.bf16.msra.mxu0 0
      %435 = vmatprep.subr.bf16.mxu0 0
      %436 = vmatpush1.bf16.msra.mxu0 0
      %437 = vmatprep.subr.bf16.mxu0 0
      %438 = vmatpush1.bf16.msra.mxu0 0
      %439 = vmatprep.subr.bf16.mxu0 0
      %440 = vmatpush1.bf16.msra.mxu0 0
      %441 = vmatprep.subr.bf16.mxu0 0
      %442 = vmatpush1.bf16.msra.mxu0 0
      %443 = vmatprep.subr.bf16.mxu0 0
      %444 = vmatpush1.bf16.msra.mxu0 0
      %445 = vmatprep.subr.bf16.mxu0 0
      %446 = vmatpush1.bf16.msra.mxu0 0
      %447 = vmatprep.subr.bf16.mxu0 0
      %448 = vmatpush1.bf16.msra.mxu0 %v431
      %449 = vmatprep.subr.bf16.mxu0 0
      %450 = vmatpush2.bf16.msra.mxu0 0
      %451 = vmatprep.subr.bf16.mxu0 0
      %452 = vmatpush2.bf16.msra.mxu0 0
      %453 = vmatprep.subr.bf16.mxu0 0
      %454 = vmatpush2.bf16.msra.mxu0 0
      %455 = vmatprep.subr.bf16.mxu0 0
      %456 = vmatpush2.bf16.msra.mxu0 0
      %457 = vmatprep.subr.bf16.mxu0 0
      %458 = vmatpush2.bf16.msra.mxu0 0
      %459 = vmatprep.subr.bf16.mxu0 0
      %460 = vmatpush2.bf16.msra.mxu0 0
      %461 = vmatprep.subr.bf16.mxu0 0
      %462 = vmatpush2.bf16.msra.mxu0 0
      %463 = vmatprep.subr.bf16.mxu0 0
      %464 = vmatpush2.bf16.msra.mxu0 0
      %465 = vmatprep.mubr.bf16.mxu0 0
      %466 = vmatmul.mubr.bf16.gmra.mxu0 %v429
      %v467 = vpop.f32.mrf.mxu0
      %v468 = vadd.f32 0.0, %v467
      %v469 = vpop.f32.mrf.mxu0
      %v470 = vpop.f32.mrf.mxu0
      %v471 = vpop.f32.mrf.mxu0
      %472 = vdwg.mxu0
      %v473 = vld [vmem:[%s6] sm:$0xf]
      %v474 = vld [vmem:[%s6 + $0x4] sm:$0xf]
      %v475 = vld [vmem:[%s6 + $0x8] sm:$0xf]
      %v476 = vld [vmem:[%s6 + $0xc] sm:$0xf]
      %v477 = vpack.c.bf16 %v423, %v423
      %v478 = vpack.c.bf16 %v468, %v468
      %v479 = vld [vmem:[%s7] sm:$0xf]
      %v480 = vld [vmem:[%s7 + $0x4] sm:$0xf]
      %v481 = vld [vmem:[%s7 + $0x8] sm:$0xf]
      %v482 = vld [vmem:[%s7 + $0xc] sm:$0xf]
      %v485 = vunpack.c.l.b16 %v477
      %v486 = vunpack.c.l.b16 %v478
      %v487 = vrot.slane %v486, 7
      %v488 = vsel %vm347, %v487, %v485
      %v489 = vpack.c.b16 %v488, %v488
      %v494 = vunpack.c.l.b16 %v479
      %v495 = vunpack.c.l.b16 %v480
      %v496 = vunpack.c.l.b16 %v481
      %v497 = vunpack.c.l.b16 %v482
      %v498 = vpack.c.b16 %v495, %v494
      %v499 = vpack.c.b16 %v497, %v496
      %v503 = vsel %vm66, %v489, 0
      %505 = vmatprep.subr.bf16.mxu0 0
      %506 = vmatpush1.bf16.msra.mxu0 0
      %507 = vmatprep.subr.bf16.mxu0 0
      %508 = vmatpush1.bf16.msra.mxu0 0
      %509 = vmatprep.subr.bf16.mxu0 0
      %510 = vmatpush1.bf16.msra.mxu0 0
      %511 = vmatprep.subr.bf16.mxu0 0
      %512 = vmatpush1.bf16.msra.mxu0 0
      %513 = vmatprep.subr.bf16.mxu0 0
      %514 = vmatpush1.bf16.msra.mxu0 0
      %515 = vmatprep.subr.bf16.mxu0 0
      %516 = vmatpush1.bf16.msra.mxu0 0
      %517 = vmatprep.subr.bf16.mxu0 0
      %518 = vmatpush1.bf16.msra.mxu0 %v499
      %519 = vmatprep.subr.bf16.mxu0 0
      %520 = vmatpush1.bf16.msra.mxu0 %v498
      %521 = vmatprep.subr.bf16.mxu0 0
      %522 = vmatpush2.bf16.msra.mxu0 0
      %523 = vmatprep.subr.bf16.mxu0 0
      %524 = vmatpush2.bf16.msra.mxu0 0
      %525 = vmatprep.subr.bf16.mxu0 0
      %526 = vmatpush2.bf16.msra.mxu0 0
      %527 = vmatprep.subr.bf16.mxu0 0
      %528 = vmatpush2.bf16.msra.mxu0 0
      %529 = vmatprep.subr.bf16.mxu0 0
      %530 = vmatpush2.bf16.msra.mxu0 0
      %531 = vmatprep.subr.bf16.mxu0 0
      %532 = vmatpush2.bf16.msra.mxu0 0
      %533 = vmatprep.subr.bf16.mxu0 0
      %534 = vmatpush2.bf16.msra.mxu0 0
      %535 = vmatprep.subr.bf16.mxu0 0
      %536 = vmatpush2.bf16.msra.mxu0 0
      %537 = vmatprep.mubr.bf16.mxu0 0
      %538 = vmatmul.mubr.bf16.gmra.mxu0 %v503
      %v539 = vpop.f32.mrf.mxu0
      %v540 = vadd.f32 0.0, %v539
      %v541 = vpop.f32.mrf.mxu0
      %v542 = vpop.f32.mrf.mxu0
      %v543 = vpop.f32.mrf.mxu0
      %544 = vdwg.mxu0
      %545 = vrot.lane.b32.xlu0 %v220, 96
      %v546 = vpop.permute.xlu0 %545
      %v551 = vunpack.c.l.b16 %v473
      %v552 = vunpack.c.l.b16 %v474
      %v553 = vunpack.c.l.b16 %v475
      %v554 = vunpack.c.l.b16 %v476
      %v555 = vpack.c.b16 %v552, %v551
      %v556 = vpack.c.b16 %v554, %v553
      %v560 = vsel %vm66, %v546, 0
      %562 = vmatprep.subr.bf16.mxu0 0
      %563 = vmatpush1.bf16.msra.mxu0 0
      %564 = vmatprep.subr.bf16.mxu0 0
      %565 = vmatpush1.bf16.msra.mxu0 0
      %566 = vmatprep.subr.bf16.mxu0 0
      %567 = vmatpush1.bf16.msra.mxu0 0
      %568 = vmatprep.subr.bf16.mxu0 0
      %569 = vmatpush1.bf16.msra.mxu0 0
      %570 = vmatprep.subr.bf16.mxu0 0
      %571 = vmatpush1.bf16.msra.mxu0 0
      %572 = vmatprep.subr.bf16.mxu0 0
      %573 = vmatpush1.bf16.msra.mxu0 0
      %574 = vmatprep.subr.bf16.mxu0 0
      %575 = vmatpush1.bf16.msra.mxu0 %v556
      %576 = vmatprep.subr.bf16.mxu0 0
      %577 = vmatpush1.bf16.msra.mxu0 %v555
      %578 = vmatprep.subr.bf16.mxu0 0
      %579 = vmatpush2.bf16.msra.mxu0 0
      %580 = vmatprep.subr.bf16.mxu0 0
      %581 = vmatpush2.bf16.msra.mxu0 0
      %582 = vmatprep.subr.bf16.mxu0 0
      %583 = vmatpush2.bf16.msra.mxu0 0
      %584 = vmatprep.subr.bf16.mxu0 0
      %585 = vmatpush2.bf16.msra.mxu0 0
      %586 = vmatprep.subr.bf16.mxu0 0
      %587 = vmatpush2.bf16.msra.mxu0 0
      %588 = vmatprep.subr.bf16.mxu0 0
      %589 = vmatpush2.bf16.msra.mxu0 0
      %590 = vmatprep.subr.bf16.mxu0 0
      %591 = vmatpush2.bf16.msra.mxu0 0
      %592 = vmatprep.subr.bf16.mxu0 0
      %593 = vmatpush2.bf16.msra.mxu0 0
      %594 = vmatprep.mubr.bf16.mxu0 0
      %595 = vmatmul.mubr.bf16.gmra.mxu0 %v560
      %v596 = vpop.f32.mrf.mxu0
      %v597 = vadd.f32 %v540, %v596
      %v598 = vpop.f32.mrf.mxu0
      %v599 = vpop.f32.mrf.mxu0
      %v600 = vpop.f32.mrf.mxu0
      %601 = vdwg.mxu0
      %v602 = vld [vmem:[%s8] sm:$0x1]
      %v604 = vlaneseq
      %v605 = vshrl.u32 %v604, 7
      %v606 = vsub.s32 0, %v605
      %v607 = vrot.slane %v602, %v606
      %v609 = vadd.f32 %v597, %v607
      %v610 = vtanh.pop %v609
      %v611 = vpack.c.bf16 %v610, %v610
      %vm612 = vcmask 253952
      %613 = vst.msk [vmem:[#allocation2] sm:$0x1] %vm612, %v611
    $region49: #{attn_decoder_forward.1} parent=1 // pred_fallthru
      _
    %v614 = vld [vmem:[#allocation2] sm:$0x1]
    %v615 = vld [vmem:[%s9] sm:$0xf]
    %v616 = vld [vmem:[%s9 + $0x4] sm:$0xf]
    %v617 = vld [vmem:[%s9 + $0x8] sm:$0xf]
    %v618 = vld [vmem:[%s9 + $0xc] sm:$0xf]
    %v619 = vld [vmem:[%s10] sm:$0x1]
    %v621 = vlaneseq
    %v622 = vshrl.u32 %v621, 7
    %v623 = vsub.s32 0, %v622
    %v624 = vrot.slane %v619, %v623
    %v630 = vunpack.c.l.b16 %v615
    %v631 = vunpack.c.l.b16 %v616
    %v632 = vunpack.c.l.b16 %v617
    %v633 = vunpack.c.l.b16 %v618
    %v634 = vpack.c.b16 %v631, %v630
    %v635 = vpack.c.b16 %v633, %v632
    %vm638 = vcmask 261120
    %v640 = vsel %vm638, %v614, 0
    %642 = vmatprep.subr.bf16.mxu0 0
    %643 = vmatpush1.bf16.msra.mxu0 0
    %644 = vmatprep.subr.bf16.mxu0 0
    %645 = vmatpush1.bf16.msra.mxu0 0
    %646 = vmatprep.subr.bf16.mxu0 0
    %647 = vmatpush1.bf16.msra.mxu0 0
    %648 = vmatprep.subr.bf16.mxu0 0
    %649 = vmatpush1.bf16.msra.mxu0 0
    %650 = vmatprep.subr.bf16.mxu0 0
    %651 = vmatpush1.bf16.msra.mxu0 0
    %652 = vmatprep.subr.bf16.mxu0 0
    %653 = vmatpush1.bf16.msra.mxu0 0
    %654 = vmatprep.subr.bf16.mxu0 0
    %655 = vmatpush1.bf16.msra.mxu0 %v635
    %656 = vmatprep.subr.bf16.mxu0 0
    %657 = vmatpush1.bf16.msra.mxu0 %v634
    %658 = vmatprep.subr.bf16.mxu0 0
    %659 = vmatpush2.bf16.msra.mxu0 0
    %660 = vmatprep.subr.bf16.mxu0 0
    %661 = vmatpush2.bf16.msra.mxu0 0
    %662 = vmatprep.subr.bf16.mxu0 0
    %663 = vmatpush2.bf16.msra.mxu0 0
    %664 = vmatprep.subr.bf16.mxu0 0
    %665 = vmatpush2.bf16.msra.mxu0 0
    %666 = vmatprep.subr.bf16.mxu0 0
    %667 = vmatpush2.bf16.msra.mxu0 0
    %668 = vmatprep.subr.bf16.mxu0 0
    %669 = vmatpush2.bf16.msra.mxu0 0
    %670 = vmatprep.subr.bf16.mxu0 0
    %671 = vmatpush2.bf16.msra.mxu0 0
    %672 = vmatprep.subr.bf16.mxu0 0
    %673 = vmatpush2.bf16.msra.mxu0 0
    %674 = vmatprep.mubr.bf16.mxu0 0
    %675 = vmatmul.mubr.bf16.gmra.mxu0 %v640
    %v676 = vpop.f32.mrf.mxu0
    %v677 = vadd.f32 %v624, %v676
    %v678 = vpop.f32.mrf.mxu0
    %v679 = vpop.f32.mrf.mxu0
    %v680 = vpop.f32.mrf.mxu0
    %681 = vdwg.mxu0
    %s682 = smul.u32 0, 128
    %s683 = sshra.s32 %s682, 7
    %s684 = sand.u32 %s682, 127
    %s685 = scalar_lea.vmem [#allocation3], %s683
    %686 = vst [vmem:[%s685] sm:$0x3] %v677
    // Predicated region
    $region50: #{attn_decoder_forward.1} parent=1 // pred_check
      %p687 = pneg %p42
    $region51: #{attn_decoder_forward.1} parent=1 // pred_check_branch
      %689 = sbr.rel (%p687) target = $region53
    $region52: #{attn_decoder_forward.1} parent=1 // pred_region
      %v690 = vld [vmem:[#allocation3] sm:$0x3]
      %vm691 = vcmask 1041408
      %v692 = vsel %vm691, %v690, -inf
      %693 = vmax.xlane.f32.xlu0 %v692
      %v694 = vpop.xlane.xlu0 %693
      %v695 = vsub.f32 %v690, %v694
      %v696 = vmul.f32 %v695, 1.442695
      %v697 = vpow.pop %v696
      %v698 = vsel %vm691, %v697, 0.0
      %699 = vadd.xlane.f32.xlu0 %v698
      %v700 = vpop.xlane.xlu0 %699
      %v701 = vrcp.pop %v700
      %v702 = vmul.f32 %v697, %v701
      %703 = vst [vmem:[#allocation3] sm:$0x3] %v702
    $region53: #{attn_decoder_forward.1} parent=1 // pred_fallthru
      _
    // Predicated region
    $region54: #{attn_decoder_forward.1} parent=1 // pred_check
      _
    $region55: #{attn_decoder_forward.1} parent=1 // pred_check_branch
      %705 = sbr.rel (0) target = $region57
    $region56: #{attn_decoder_forward.1} parent=1 // pred_region
      %s707 = ssub.s32 32, 32
      %708 = vsyncadd [#allocation4], %s707
      %s710 = sshll.u32 [#allocation3], 4
      %s711 = int_to_ptr.vmem [resolvable:$true] %s710
      %713 = dma.vmem_to_hbm [thread:$0]  %s711, 32, %s11, [#allocation4]
    $region57: #{attn_decoder_forward.1} parent=1 // pred_fallthru
      _
    // Predicated region
    $region58: #{attn_decoder_forward.1} parent=1 // pred_check
      _
    $region59: #{attn_decoder_forward.1} parent=1 // pred_check_branch
      %715 = sbr.rel (0) target = $region61
    $region60: #{attn_decoder_forward.1} parent=1 // pred_region
      _
    $region61: #{attn_decoder_forward.1} parent=1 // pred_fallthru
      _
    // Predicated region
    $region62: #{attn_decoder_forward.1} parent=1 // pred_check
      _
    $region63: #{attn_decoder_forward.1} parent=1 // pred_check_branch
      %717 = sbr.rel (0) target = $region65
    $region64: #{attn_decoder_forward.1} parent=1 // pred_region
      %718 = dma.done [#allocation4], 32
    $region65: #{attn_decoder_forward.1} parent=1 // pred_fallthru
      _
    // Predicated region
    $region66: #{attn_decoder_forward.1} parent=1 // pred_check
      _
    $region67: #{attn_decoder_forward.1} parent=1 // pred_check_branch
      %720 = sbr.rel (0) target = $region69
    $region68: #{attn_decoder_forward.1} parent=1 // pred_region
      _
    $region69: #{attn_decoder_forward.1} parent=1 // pred_fallthru
      _
    %721 = vsyncpa [#allocation4], 1

</llo_original>
